<compile_context>
chip_gen: v6e
topology: v6e:2x2x1
jax: 0.10.0
libtpu: 0.0.40
codegen_flags: <defaults>
</compile_context>

<pallas_src>
import jax
import jax.numpy as jnp
import numpy as np
from jax import lax
from jax.experimental import pallas as pl
from jax.experimental.pallas import tpu as pltpu


# --------------------------- Pallas kernel ---------------------------
def _embed_kernel(xp_ref, w_ref, b_ref, pos_ref, o_ref):
    """One (batch, patch-tile) grid step of the patch-embedding projection.

    xp_ref : (1, TN, K)   bf16  flattened patches for this batch / row tile
    w_ref  : (K, HID)     bf16  conv-as-matmul weight
    b_ref  : (1, HID)     f32   conv bias
    pos_ref: (TN, HID)    f32   positional-embedding rows for this tile
    o_ref  : (1, TN, HID) f32
    """
    acc = jnp.dot(xp_ref[0], w_ref[...], preferred_element_type=jnp.float32)
    o_ref[0] = (acc + b_ref[...] + pos_ref[...]).astype(o_ref.dtype)


def _pick_patch_tile(num_patches):
    # Prefer big, MXU-friendly row tiles; fall back to the whole patch axis.
    for t in (512, 256, 128):
        if num_patches % t == 0:
            return t
    return num_patches


# --------------------------- wrapper ---------------------------
def embeddings_forward(x, params, *, patch_size):
    ph, pw = patch_size
    B, C, H, W = x.shape
    gh, gw = H // ph, W // pw
    num_patches = gh * gw
    K = C * ph * pw
    hidden = params["w"].shape[1]

    # Patch extraction = pure layout plumbing (reshape/transpose), done in the
    # wrapper so the kernel sees a dense (rows, K) slab. The bf16 cast fuses
    # into this transpose and halves the HBM bytes the kernel has to DMA.
    xp = x.reshape(B, C, gh, ph, gw, pw).transpose(0, 2, 4, 1, 3, 5)
    xp = xp.reshape(B, num_patches, K).astype(jnp.bfloat16)

    w_bf16 = params["w"].astype(jnp.bfloat16)

    TN = _pick_patch_tile(num_patches)
    grid = (B, num_patches // TN)

    out = pl.pallas_call(
        _embed_kernel,
        out_shape=jax.ShapeDtypeStruct((B, num_patches, hidden), jnp.float32),
        grid=grid,
        in_specs=[
            pl.BlockSpec((1, TN, K), lambda b, n: (b, n, 0)),      # patches
            pl.BlockSpec((K, hidden), lambda b, n: (0, 0)),        # weight (grid-invariant)
            pl.BlockSpec((1, hidden), lambda b, n: (0, 0)),        # bias
            pl.BlockSpec((TN, hidden), lambda b, n: (n, 0)),       # positional rows
        ],
        out_specs=pl.BlockSpec((1, TN, hidden), lambda b, n: (b, n, 0)),
        compiler_params=pltpu.CompilerParams(
            dimension_semantics=("parallel", "parallel")),
    )(xp, w_bf16, params["b"], params["pos"])

    # Dropout(p=0.0) is the identity.
    # TODO(synk): training-time dropout with p > 0 (pltpu.prng_*) not implemented.
    return out


# --------------------------- deterministic parameter init ---------------------------
def init_params(key, in_channels, patch_size, num_patches, hidden_dim):
    ph, pw = patch_size
    K = in_channels * ph * pw
    kw_, kb_, kp_ = jax.random.split(key, 3)
    return dict(
        # weight stored as (C*ph*pw, hidden) = conv weight flattened in (C, kh, kw) order
        w=jax.random.normal(kw_, (K, hidden_dim), jnp.float32) * 0.02,
        b=jax.random.normal(kb_, (1, hidden_dim), jnp.float32) * 0.02,
        pos=jax.random.normal(kp_, (num_patches, hidden_dim), jnp.float32),
    )


# --------------------------- pure-JAX reference (via real conv) ---------------------------
def embeddings_ref(x, params, *, patch_size):
    ph, pw = patch_size
    B, C, H, W = x.shape
    hidden = params["w"].shape[1]
    # PyTorch Conv2d weight layout is (out, in, kh, kw); ours is (in*kh*kw, out).
    w_conv = params["w"].T.reshape(hidden, C, ph, pw)
    y = lax.conv_general_dilated(
        x, w_conv, window_strides=(ph, pw), padding="VALID",
        dimension_numbers=("NCHW", "OIHW", "NCHW"))
    y = y + params["b"].reshape(1, hidden, 1, 1)
    y = y.reshape(B, hidden, -1).transpose(0, 2, 1)  # flatten(2) + transpose(-1,-2)
    return y + params["pos"][None]


if __name__ == "__main__":
    B, C = 2, 4
    image_size = (16, 16)
    patch_size = (4, 4)
    hidden_dim = patch_size[0] * patch_size[1] * C                                  # 64 (PyTorch default)
    num_patches = (image_size[0] // patch_size[0]) * (image_size[1] // patch_size[1])  # 16

    key = jax.random.PRNGKey(0)
    kx, kp = jax.random.split(key)
    x = jax.random.normal(kx, (B, C, *image_size), jnp.float32)
    params = init_params(kp, C, patch_size, num_patches, hidden_dim)

    out = embeddings_forward(x, params, patch_size=patch_size)
    out = jax.block_until_ready(out)

    ref = embeddings_ref(x, params, patch_size=patch_size)
    # Tolerance accounts for bf16 MXU inputs (f32 accumulation) vs the f32 reference.
    np.testing.assert_allclose(np.asarray(out), np.asarray(ref), rtol=2e-2, atol=2e-2)

    print("KERNEL_OK")
</pallas_src>

<mosaic_0001>
module attributes {stable_mosaic.version = 11 : i64} {
  func.func @_embed_kernel(%arg0: i32, %arg1: i32, %arg2: memref<1x16x64xbf16, #tpu.memory_space<vmem>>, %arg3: memref<64x64xbf16, #tpu.memory_space<vmem>>, %arg4: memref<1x64xf32, #tpu.memory_space<vmem>>, %arg5: memref<16x64xf32, #tpu.memory_space<vmem>>, %arg6: memref<1x16x64xf32, #tpu.memory_space<vmem>>) attributes {dimension_semantics = [#tpu.dimension_semantics<parallel>, #tpu.dimension_semantics<parallel>], iteration_bounds = array<i64: 2, 1>, scalar_prefetch = 0 : i64, scratch_operands = 0 : i64, tpu.core_type = #tpu.core_type<tc>, window_params = [{transform_indices = @transform_0, window_bounds = array<i64: 1, 16, 64>}, {pipeline_mode = #tpu.pipeline_mode<synchronous>, transform_indices = @transform_1, window_bounds = array<i64: 64, 64>}, {pipeline_mode = #tpu.pipeline_mode<synchronous>, transform_indices = @transform_2, window_bounds = array<i64: 1, 64>}, {transform_indices = @transform_3, window_bounds = array<i64: 16, 64>}, {transform_indices = @transform_4, window_bounds = array<i64: 1, 16, 64>}]} {
    %c0 = arith.constant 0 : index
    %c0_0 = arith.constant 0 : index
    %c0_1 = arith.constant 0 : index
    %0 = vector.load %arg2[%c0, %c0_0, %c0_1] : memref<1x16x64xbf16, #tpu.memory_space<vmem>>, vector<1x16x64xbf16>
    %1 = vector.shape_cast %0 : vector<1x16x64xbf16> to vector<16x64xbf16>
    %c0_2 = arith.constant 0 : index
    %c0_3 = arith.constant 0 : index
    %2 = vector.load %arg3[%c0_2, %c0_3] : memref<64x64xbf16, #tpu.memory_space<vmem>>, vector<64x64xbf16>
    %cst = arith.constant dense<0.000000e+00> : vector<16x64xf32>
    %3 = tpu.matmul %1, %2, %cst {dimension_numbers = #tpu.dot_dimension_numbers<[1], [0], [0], [1], [0, 0, 1, 1], [], []>} : vector<16x64xbf16>, vector<64x64xbf16>, vector<16x64xf32> -> vector<16x64xf32>
    %c0_4 = arith.constant 0 : index
    %c0_5 = arith.constant 0 : index
    %4 = vector.load %arg4[%c0_4, %c0_5] : memref<1x64xf32, #tpu.memory_space<vmem>>, vector<1x64xf32>
    %5 = vector.broadcast %4 : vector<1x64xf32> to vector<16x64xf32>
    %6 = arith.addf %3, %5 : vector<16x64xf32>
    %c0_6 = arith.constant 0 : index
    %c0_7 = arith.constant 0 : index
    %7 = vector.load %arg5[%c0_6, %c0_7] : memref<16x64xf32, #tpu.memory_space<vmem>>, vector<16x64xf32>
    %8 = arith.addf %6, %7 : vector<16x64xf32>
    %c0_8 = arith.constant 0 : index
    %c0_9 = arith.constant 0 : index
    %c0_10 = arith.constant 0 : index
    %9 = vector.load %arg6[%c0_8, %c0_9, %c0_10] : memref<1x16x64xf32, #tpu.memory_space<vmem>>, vector<1x16x64xf32>
    %10 = vector.shape_cast %9 : vector<1x16x64xf32> to vector<16x64xf32>
    %11 = vector.shape_cast %8 : vector<16x64xf32> to vector<1x16x64xf32>
    tpu.vector_store %arg6[%c0_8, %c0_9, %c0_10], %11 {strides = array<i32>} : memref<1x16x64xf32, #tpu.memory_space<vmem>>, vector<1x16x64xf32>,
    return
  }
  func.func @transform_0(%arg0: i32, %arg1: i32) -> (i32, i32, i32) {
    %c0_i32 = arith.constant 0 : i32
    %c0_i32_0 = arith.constant 0 : i32
    return %arg0, %arg1, %c0_i32 : i32, i32, i32
  }
  func.func @transform_1(%arg0: i32, %arg1: i32) -> (i32, i32) {
    %c0_i32 = arith.constant 0 : i32
    %c0_i32_0 = arith.constant 0 : i32
    %c0_i32_1 = arith.constant 0 : i32
    return %c0_i32, %c0_i32_0 : i32, i32
  }
  func.func @transform_2(%arg0: i32, %arg1: i32) -> (i32, i32) {
    %c0_i32 = arith.constant 0 : i32
    %c0_i32_0 = arith.constant 0 : i32
    %c0_i32_1 = arith.constant 0 : i32
    return %c0_i32, %c0_i32_0 : i32, i32
  }
  func.func @transform_3(%arg0: i32, %arg1: i32) -> (i32, i32) {
    %c0_i32 = arith.constant 0 : i32
    %c0_i32_0 = arith.constant 0 : i32
    return %arg1, %c0_i32 : i32, i32
  }
  func.func @transform_4(%arg0: i32, %arg1: i32) -> (i32, i32, i32) {
    %c0_i32 = arith.constant 0 : i32
    %c0_i32_0 = arith.constant 0 : i32
    return %arg0, %arg1, %c0_i32 : i32, i32, i32
  }
}

</mosaic_0001>

<llo_original>
// kernel: tpu_custom_call.1
$region0: #{tpu_custom_call.1}
  #allocation0 [shape = 'u32[]', space=smem, size = 0x4, offset = 0x4, fixed_abs, tag = 'smem constant byte address 0x4 - core index']
  #allocation1 [shape = 'u32[144,128]{1,0:T(1,128)}', space=vmem, size = 0x12000, scoped, tag = 'internal scratch']
  %s0 = inlined_call_operand.hbm [shape: bf16[2,16,64], index: 0, kind: input, shape index: {}]
  %s1 = inlined_call_operand.hbm [shape: bf16[64,64], index: 1, kind: input, shape index: {}]
  %s2 = inlined_call_operand.vmem [shape: f32[1,64], index: 2, kind: input, shape index: {}]
  %s3 = inlined_call_operand.hbm [shape: f32[16,64], index: 3, kind: input, shape index: {}]
  %s4 = inlined_call_operand.hbm [shape: f32[2,16,64], index: 4, kind: output, shape index: {}]
  %s5 = sld [smem:[#allocation0]]
  $region61: #{tpu_custom_call.1} parent=0
    _
  %s7 = ssub.s32 1, %s5
  %s8 = scalar_select 0, %s7, %s5
  $region1: #{tpu_custom_call.1} parent=0
    #allocation2 [shape = 'u8[8192]{0}', space=vmem, size = 0x2000, scoped, tag = 'input window, operand 0']
    #allocation3 [shape = 's32[2]{0}', space=sflag, size = 0x8, scoped, tag = 'scoped memory for tpu_custom_call.1']
    #allocation4 [shape = 's32[2]{0}', space=sflag, size = 0x8, scoped, tag = 'scoped memory for tpu_custom_call.1']
    #allocation5 [shape = 'u8[16384]{0}', space=vmem, size = 0x4000, scoped, tag = 'input window, operand 1, single buffered']
    #allocation6 [shape = 's32[1]{0}', space=sflag, size = 0x4, scoped, tag = 'scoped memory for tpu_custom_call.1']
    #allocation7 [shape = 'u8[8192]{0}', space=vmem, size = 0x2000, scoped, tag = 'input window, operand 3, single buffered']
    #allocation8 [shape = 'u8[16384]{0}', space=vmem, size = 0x4000, scoped, tag = 'output window, operand 0']
    %9 = vsyncpa [#allocation3], 0
    %s10 = scalar_lea.sflag [#allocation3], 1
    %11 = vsyncpa %s10, 0
    %12 = vsyncpa [#allocation6], 0
    %13 = vsyncpa [#allocation4], 0
    %s14 = scalar_lea.sflag [#allocation4], 1
    %15 = vsyncpa %s14, 0
    loop: start=0, step=1, limit=4
    $region2: #{tpu_custom_call.1} parent=1 // loop_pre_header
      _
    $region3: #{tpu_custom_call.1} parent=1 // loop_header
      %s17 = sphi 0, %s21
      %p18 = scmp.ge.s32.totalorder %s17, 4
      %s24 = sphi 0, %s36
      %s25 = sphi 0, %s32
      %s26 = sphi 0, %s24
      %s27 = sphi 0, %s25
      %s28 = sphi 0, %s26
      %s29 = sphi 0, %s27
      %s41 = sphi 0, %s43
      %s44 = sphi 0, %s41
      %s45 = sphi 0, %s44
      %s61 = sphi 0, %s45
      %s65 = sphi 0, %s65
      %s67 = sphi 0, %s65
      %s68 = sphi 0, %s67
      %s82 = sphi 0, %s68
      %s86 = sphi 0, %s86
      %s88 = sphi 0, %s86
      %s89 = sphi 0, %s88
      %s103 = sphi 0, %s89
      %s109 = sphi 0, %s111
      %s112 = sphi 0, %s109
      %s113 = sphi 0, %s112
      %s129 = sphi 0, %s113
      %s137 = sphi 0, %s139
      %s140 = sphi 0, %s137
      %s141 = sphi 0, %s140
      %s157 = sphi 0, %s141
    $region4: #{tpu_custom_call.1} parent=1 // loop_header_branch
      %20 = sbr.rel (%p18) target = $region8
    $region5: #{tpu_custom_call.1} parent=1 // loop_body
      %s22 = ssub.s32 %s17, 1
      %s23 = ssub.s32 %s17, 2
      %s30 = sadd.s32 1, %s25
      %p31 = scmp.ge.s32.totalorder %s30, 1
      %s32 = scalar_select %p31, 0, %s30
      %s33 = sadd.s32 1, %s24
      %s34 = scalar_select %p31, %s33, %s24
      %p35 = scmp.ge.s32.totalorder %s34, 2
      %s36 = scalar_select %p35, 0, %s34
      %s37 = ssub.s32 %s24, %s36
      %s38 = ssub.s32 %s25, %s32
      %s39 = sor.u32 %s37, %s38
      %p40 = scmp.eq.s32.totalorder %s39, 0
      %s42 = sadd.s32 %s41, 1
      %s43 = scalar_select %p40, %s41, %s42
      %p46 = pneg %p40
      %p47 = scmp.eq.s32.totalorder %s17, 1
      %p48 = por %p46, %p47
      %p49 = scmp.ne.s32.totalorder %s41, %s44
      %p50 = scmp.eq.s32.totalorder %s17, 0
      %p51 = por %p49, %p50
      %p52 = scmp.ne.s32.totalorder %s41, %s44
      %p53 = scmp.eq.s32.totalorder %s22, 1
      %p54 = por %p52, %p53
      %p55 = scmp.ne.s32.totalorder %s44, %s45
      %p56 = scmp.eq.s32.totalorder %s22, 0
      %p57 = por %p55, %p56
      %p58 = scmp.ne.s32.totalorder %s44, %s45
      %p59 = scmp.eq.s32.totalorder %s23, 1
      %p60 = por %p58, %p59
      %p62 = scmp.ne.s32.totalorder %s45, %s61
      %p63 = scmp.eq.s32.totalorder %s23, 0
      %p64 = por %p62, %p63
      %s66 = sadd.s32 %s65, 1
      %p69 = scmp.eq.s32.totalorder %s17, 1
      %p70 = scmp.ne.s32.totalorder %s65, %s67
      %p71 = scmp.eq.s32.totalorder %s17, 0
      %p72 = por %p70, %p71
      %p73 = scmp.ne.s32.totalorder %s65, %s67
      %p74 = scmp.eq.s32.totalorder %s22, 1
      %p75 = por %p73, %p74
      %p76 = scmp.ne.s32.totalorder %s67, %s68
      %p77 = scmp.eq.s32.totalorder %s22, 0
      %p78 = por %p76, %p77
      %p79 = scmp.ne.s32.totalorder %s67, %s68
      %p80 = scmp.eq.s32.totalorder %s23, 1
      %p81 = por %p79, %p80
      %p83 = scmp.ne.s32.totalorder %s68, %s82
      %p84 = scmp.eq.s32.totalorder %s23, 0
      %p85 = por %p83, %p84
      %s87 = sadd.s32 %s86, 1
      %p90 = scmp.eq.s32.totalorder %s17, 1
      %p91 = scmp.ne.s32.totalorder %s86, %s88
      %p92 = scmp.eq.s32.totalorder %s17, 0
      %p93 = por %p91, %p92
      %p94 = scmp.ne.s32.totalorder %s86, %s88
      %p95 = scmp.eq.s32.totalorder %s22, 1
      %p96 = por %p94, %p95
      %p97 = scmp.ne.s32.totalorder %s88, %s89
      %p98 = scmp.eq.s32.totalorder %s22, 0
      %p99 = por %p97, %p98
      %p100 = scmp.ne.s32.totalorder %s88, %s89
      %p101 = scmp.eq.s32.totalorder %s23, 1
      %p102 = por %p100, %p101
      %p104 = scmp.ne.s32.totalorder %s89, %s103
      %p105 = scmp.eq.s32.totalorder %s23, 0
      %p106 = por %p104, %p105
      %s107 = ssub.s32 %s25, %s32
      %p108 = scmp.eq.s32.totalorder %s107, 0
      %s110 = sadd.s32 %s109, 1
      %s111 = scalar_select %p108, %s109, %s110
      %p114 = pneg %p108
      %p115 = scmp.eq.s32.totalorder %s17, 1
      %p116 = por %p114, %p115
      %p117 = scmp.ne.s32.totalorder %s109, %s112
      %p118 = scmp.eq.s32.totalorder %s17, 0
      %p119 = por %p117, %p118
      %p120 = scmp.ne.s32.totalorder %s109, %s112
      %p121 = scmp.eq.s32.totalorder %s22, 1
      %p122 = por %p120, %p121
      %p123 = scmp.ne.s32.totalorder %s112, %s113
      %p124 = scmp.eq.s32.totalorder %s22, 0
      %p125 = por %p123, %p124
      %p126 = scmp.ne.s32.totalorder %s112, %s113
      %p127 = scmp.eq.s32.totalorder %s23, 1
      %p128 = por %p126, %p127
      %p130 = scmp.ne.s32.totalorder %s113, %s129
      %p131 = scmp.eq.s32.totalorder %s23, 0
      %p132 = por %p130, %p131
      %s133 = ssub.s32 %s24, %s36
      %s134 = ssub.s32 %s25, %s32
      %s135 = sor.u32 %s133, %s134
      %p136 = scmp.eq.s32.totalorder %s135, 0
      %s138 = sadd.s32 %s137, 1
      %s139 = scalar_select %p136, %s137, %s138
      %p142 = pneg %p136
      %p143 = scmp.eq.s32.totalorder %s17, 1
      %p144 = por %p142, %p143
      %p145 = scmp.ne.s32.totalorder %s137, %s140
      %p146 = scmp.eq.s32.totalorder %s17, 0
      %p147 = por %p145, %p146
      %p148 = scmp.ne.s32.totalorder %s137, %s140
      %p149 = scmp.eq.s32.totalorder %s22, 1
      %p150 = por %p148, %p149
      %p151 = scmp.ne.s32.totalorder %s140, %s141
      %p152 = scmp.eq.s32.totalorder %s22, 0
      %p153 = por %p151, %p152
      %p154 = scmp.ne.s32.totalorder %s140, %s141
      %p155 = scmp.eq.s32.totalorder %s23, 1
      %p156 = por %p154, %p155
      %p158 = scmp.ne.s32.totalorder %s141, %s157
      %p159 = scmp.eq.s32.totalorder %s23, 0
      %p160 = por %p158, %p159
      %p161 = scmp.le.s32.totalorder 1, %s17
      %p162 = scmp.lt.s32.totalorder %s17, 3
      %p163 = pnand %p161, %p162
      %p164 = pneg %p163
      // Predicated region
      $region9: #{tpu_custom_call.1} parent=5 // pred_check
        _
      $region10: #{tpu_custom_call.1} parent=5 // pred_check_branch
        %166 = sbr.rel (%p163) target = $region12
      $region11: #{tpu_custom_call.1} parent=5 // pred_region
        %s167 = ssub.s32 %s17, 1
        // Predicated region
        $region13: #{tpu_custom_call.1} parent=11 // pred_check
          %p168 = pneg %p78
        $region14: #{tpu_custom_call.1} parent=11 // pred_check_branch
          %170 = sbr.rel (%p168) target = $region16
        $region15: #{tpu_custom_call.1} parent=11 // pred_region
          %s172 = ssub.s32 512, 512
          %173 = vsyncadd [#allocation6], %s172
          %s174 = sshll.u32 [#allocation5], 4
          %s175 = int_to_ptr.vmem [resolvable:$true] %s174
          %180 = dma.hbm_to_vmem [thread:$0]  %s1, 512, %s175, [#allocation6], 64, 64, 4
        $region16: #{tpu_custom_call.1} parent=11 // pred_fallthru
          _
        // Predicated region
        $region17: #{tpu_custom_call.1} parent=11 // pred_check
          %p181 = pneg %p99
        $region18: #{tpu_custom_call.1} parent=11 // pred_check_branch
          %183 = sbr.rel (%p181) target = $region20
        $region19: #{tpu_custom_call.1} parent=11 // pred_region
          _
        $region20: #{tpu_custom_call.1} parent=11 // pred_fallthru
          _
        // Predicated region
        $region21: #{tpu_custom_call.1} parent=11 // pred_check
          %p184 = pneg %p125
        $region22: #{tpu_custom_call.1} parent=11 // pred_check_branch
          %186 = sbr.rel (%p184) target = $region24
        $region23: #{tpu_custom_call.1} parent=11 // pred_region
          %s187 = smul.u32 2, %s27
          %s189 = ssub.s32 256, 256
          %190 = vsyncadd [#allocation6], %s189
          %s191 = smul.addr %s187, 128
          %s192 = scalar_lea.hbm %s3, %s191
          %s193 = sshll.u32 [#allocation7], 4
          %s194 = int_to_ptr.vmem [resolvable:$true] %s193
          %199 = dma.hbm_to_vmem [thread:$0]  %s192, 256, %s194, [#allocation6], 128, 128, 8
        $region24: #{tpu_custom_call.1} parent=11 // pred_fallthru
          _
      $region12: #{tpu_custom_call.1} parent=5 // pred_fallthru
        _
      %p200 = scmp.lt.s32.totalorder %s17, 2
      // Predicated region
      $region25: #{tpu_custom_call.1} parent=5 // pred_check
        %p201 = pneg %p200
      $region26: #{tpu_custom_call.1} parent=5 // pred_check_branch
        %203 = sbr.rel (%p201) target = $region28
      $region27: #{tpu_custom_call.1} parent=5 // pred_region
        // Predicated region
        $region29: #{tpu_custom_call.1} parent=27 // pred_check
          %p204 = pneg %p51
        $region30: #{tpu_custom_call.1} parent=27 // pred_check_branch
          %206 = sbr.rel (%p204) target = $region32
        $region31: #{tpu_custom_call.1} parent=27 // pred_region
          %s207 = sand.u32 %s41, 1
          %s208 = scalar_lea.sflag [#allocation3], %s207
          %s209 = sand.u32 %s41, 1
          %s210 = smul.addr %s209, 8
          %s211 = scalar_lea.vmem [#allocation2], %s210
          %s212 = smul.u32 2, %s25
          %s214 = ssub.s32 128, 128
          %215 = vsyncadd %s208, %s214
          %s216 = smul.addr %s24, 2
          %s217 = sadd.s32 %s212, %s216
          %s218 = smul.addr %s217, 64
          %s219 = scalar_lea.hbm %s0, %s218
          %s220 = sshll.u32 %s211, 4
          %s221 = int_to_ptr.vmem [resolvable:$true] %s220
          %226 = dma.hbm_to_vmem [thread:$0]  %s219, 128, %s221, %s208, 64, 64, 4
        $region32: #{tpu_custom_call.1} parent=27 // pred_fallthru
          _
      $region28: #{tpu_custom_call.1} parent=5 // pred_fallthru
        _
      %p227 = scmp.le.s32.totalorder 1, %s17
      %p228 = scmp.lt.s32.totalorder %s17, 3
      %p229 = pnand %p227, %p228
      %p230 = pneg %p229
      // Predicated region
      $region33: #{tpu_custom_call.1} parent=5 // pred_check
        _
      $region34: #{tpu_custom_call.1} parent=5 // pred_check_branch
        %232 = sbr.rel (%p229) target = $region36
      $region35: #{tpu_custom_call.1} parent=5 // pred_region
        %s233 = ssub.s32 %s17, 1
        %s234 = sand.u32 %s44, 1
        %s235 = scalar_lea.sflag [#allocation3], %s234
        %s236 = sand.u32 %s44, 1
        %s237 = smul.addr %s236, 8
        %s238 = scalar_lea.vmem [#allocation2], %s237
        // Predicated region
        $region37: #{tpu_custom_call.1} parent=35 // pred_check
          %p239 = pneg %p57
        $region38: #{tpu_custom_call.1} parent=35 // pred_check_branch
          %241 = sbr.rel (%p239) target = $region40
        $region39: #{tpu_custom_call.1} parent=35 // pred_region
          %242 = dma.done %s235, 128
        $region40: #{tpu_custom_call.1} parent=35 // pred_fallthru
          _
        // Predicated region
        $region41: #{tpu_custom_call.1} parent=35 // pred_check
          %p243 = pneg %p78
        $region42: #{tpu_custom_call.1} parent=35 // pred_check_branch
          %245 = sbr.rel (%p243) target = $region44
        $region43: #{tpu_custom_call.1} parent=35 // pred_region
          %246 = dma.done [#allocation6], 512
        $region44: #{tpu_custom_call.1} parent=35 // pred_fallthru
          _
        // Predicated region
        $region45: #{tpu_custom_call.1} parent=35 // pred_check
          %p247 = pneg %p125
        $region46: #{tpu_custom_call.1} parent=35 // pred_check_branch
          %249 = sbr.rel (%p247) target = $region48
        $region47: #{tpu_custom_call.1} parent=35 // pred_region
          %250 = dma.done [#allocation6], 256
        $region48: #{tpu_custom_call.1} parent=35 // pred_fallthru
          _
        %s251 = sand.u32 %s44, 1
        %s252 = scalar_lea.sflag [#allocation3], %s251
        %s253 = sand.u32 %s44, 1
        %s254 = smul.addr %s253, 8
        %s255 = scalar_lea.vmem [#allocation2], %s254
        %p256 = pneg %p57
        %p257 = pneg %p54
        %p258 = pneg %p78
        %p259 = pneg %p75
        %p260 = pneg %p99
        %p261 = pneg %p96
        %p262 = pneg %p125
        %p263 = pneg %p122
        %p264 = pneg %p153
        %p265 = pneg %p150
        %s266 = sand.u32 %s140, 1
        %s267 = scalar_lea.sflag [#allocation4], %s266
        %s268 = sand.u32 %s140, 1
        %s269 = smul.addr %s268, 16
        %s270 = scalar_lea.vmem [#allocation8], %s269
        %s271 = smul.u32 2, %s27
        %s272 = smul.u32 2, %s27
        %s273 = smul.u32 2, %s27
        %v275 = vld [vmem:[%s238] sm:$0xf]
        %v276 = vld [vmem:[%s238 + $0x4] sm:$0xf]
        %v277 = vld [vmem:[#allocation5] sm:$0xf]
        %v278 = vld [vmem:[#allocation5 + $0x4] sm:$0xf]
        %v279 = vld [vmem:[#allocation5 + $0x8] sm:$0xf]
        %v280 = vld [vmem:[#allocation5 + $0xc] sm:$0xf]
        %v281 = vld [vmem:[#allocation5 + $0x10] sm:$0xf]
        %v282 = vld [vmem:[#allocation5 + $0x14] sm:$0xf]
        %v283 = vld [vmem:[#allocation5 + $0x18] sm:$0xf]
        %v284 = vld [vmem:[#allocation5 + $0x1c] sm:$0xf]
        %v285 = vld [vmem:[%s2] sm:$0x1]
        %v287 = vlaneseq
        %v288 = vshrl.u32 %v287, 7
        %v289 = vsub.s32 0, %v288
        %v290 = vrot.slane %v285, %v289
        %v294 = vunpack.c.l.b16 %v275
        %v295 = vunpack.c.l.b16 %v276
        %v296 = vpack.c.b16 %v295, %v294
        %v305 = vunpack.c.l.b16 %v277
        %v306 = vunpack.c.l.b16 %v278
        %v307 = vunpack.c.l.b16 %v279
        %v308 = vunpack.c.l.b16 %v280
        %v309 = vunpack.c.l.b16 %v281
        %v310 = vunpack.c.l.b16 %v282
        %v311 = vunpack.c.l.b16 %v283
        %v312 = vunpack.c.l.b16 %v284
        %v313 = vpack.c.b16 %v306, %v305
        %v314 = vpack.c.b16 %v308, %v307
        %v315 = vpack.c.b16 %v310, %v309
        %v316 = vpack.c.b16 %v312, %v311
        %vm321 = vcmask 523264
        %v323 = vsel %vm321, %v296, 0
        %325 = vmatprep.subr.bf16.mxu0 0
        %326 = vmatpush1.bf16.msra.mxu0 0
        %327 = vmatprep.subr.bf16.mxu0 0
        %328 = vmatpush1.bf16.msra.mxu0 0
        %329 = vmatprep.subr.bf16.mxu0 0
        %330 = vmatpush1.bf16.msra.mxu0 0
        %331 = vmatprep.subr.bf16.mxu0 0
        %332 = vmatpush1.bf16.msra.mxu0 0
        %333 = vmatprep.subr.bf16.mxu0 0
        %334 = vmatpush1.bf16.msra.mxu0 %v316
        %335 = vmatprep.subr.bf16.mxu0 0
        %336 = vmatpush1.bf16.msra.mxu0 %v315
        %337 = vmatprep.subr.bf16.mxu0 0
        %338 = vmatpush1.bf16.msra.mxu0 %v314
        %339 = vmatprep.subr.bf16.mxu0 0
        %340 = vmatpush1.bf16.msra.mxu0 %v313
        %341 = vmatprep.subr.bf16.mxu0 0
        %342 = vmatpush2.bf16.msra.mxu0 0
        %343 = vmatprep.subr.bf16.mxu0 0
        %344 = vmatpush2.bf16.msra.mxu0 0
        %345 = vmatprep.subr.bf16.mxu0 0
        %346 = vmatpush2.bf16.msra.mxu0 0
        %347 = vmatprep.subr.bf16.mxu0 0
        %348 = vmatpush2.bf16.msra.mxu0 0
        %349 = vmatprep.subr.bf16.mxu0 0
        %350 = vmatpush2.bf16.msra.mxu0 0
        %351 = vmatprep.subr.bf16.mxu0 0
        %352 = vmatpush2.bf16.msra.mxu0 0
        %353 = vmatprep.subr.bf16.mxu0 0
        %354 = vmatpush2.bf16.msra.mxu0 0
        %355 = vmatprep.subr.bf16.mxu0 0
        %356 = vmatpush2.bf16.msra.mxu0 0
        %357 = vmatprep.mubr.bf16.mxu0 0
        %358 = vmatmul.mubr.bf16.gmra.mxu0 %v323
        %v359 = vpop.f32.mrf.mxu0
        %v360 = vadd.f32 %v290, %v359
        %v361 = vpop.f32.mrf.mxu0
        %v362 = vpop.f32.mrf.mxu0
        %v363 = vadd.f32 %v290, %v362
        %v364 = vpop.f32.mrf.mxu0
        %365 = vdwg.mxu0
        %v366 = vld [vmem:[#allocation7] sm:$0xff]
        %v367 = vld [vmem:[#allocation7 + $0x8] sm:$0xff]
        %v368 = vadd.f32 %v360, %v366
        %v369 = vadd.f32 %v363, %v367
        %370 = vst.msk [vmem:[%s270] sm:$0xff] %vm321, %v368
        %371 = vst.msk [vmem:[%s270 + $0x8] sm:$0xff] %vm321, %v369
        %s372 = sand.u32 %s140, 1
        %s373 = scalar_lea.sflag [#allocation4], %s372
        %s374 = sand.u32 %s140, 1
        %s375 = smul.addr %s374, 16
        %s376 = scalar_lea.vmem [#allocation8], %s375
        // Predicated region
        $region49: #{tpu_custom_call.1} parent=35 // pred_check
          %p377 = pneg %p150
        $region50: #{tpu_custom_call.1} parent=35 // pred_check_branch
          %379 = sbr.rel (%p377) target = $region52
        $region51: #{tpu_custom_call.1} parent=35 // pred_region
          %s380 = smul.u32 2, %s27
          %s382 = ssub.s32 256, 256
          %383 = vsyncadd %s373, %s382
          %s384 = smul.addr %s26, 2
          %s385 = sadd.s32 %s380, %s384
          %s386 = smul.addr %s385, 128
          %s387 = scalar_lea.hbm %s4, %s386
          %s388 = sshll.u32 %s376, 4
          %s389 = int_to_ptr.vmem [resolvable:$true] %s388
          %394 = dma.vmem_to_hbm [thread:$0]  %s389, 256, %s387, %s373, 128, 128, 8
        $region52: #{tpu_custom_call.1} parent=35 // pred_fallthru
          _
      $region36: #{tpu_custom_call.1} parent=5 // pred_fallthru
        _
      %p395 = scmp.le.s32.totalorder 2, %s17
      // Predicated region
      $region53: #{tpu_custom_call.1} parent=5 // pred_check
        %p396 = pneg %p395
      $region54: #{tpu_custom_call.1} parent=5 // pred_check_branch
        %398 = sbr.rel (%p396) target = $region56
      $region55: #{tpu_custom_call.1} parent=5 // pred_region
        %s399 = ssub.s32 %s17, 2
        // Predicated region
        $region57: #{tpu_custom_call.1} parent=55 // pred_check
          %p400 = pneg %p156
        $region58: #{tpu_custom_call.1} parent=55 // pred_check_branch
          %402 = sbr.rel (%p400) target = $region60
        $region59: #{tpu_custom_call.1} parent=55 // pred_region
          %s403 = sand.u32 %s141, 1
          %s404 = scalar_lea.sflag [#allocation4], %s403
          %s405 = sand.u32 %s141, 1
          %s406 = smul.addr %s405, 16
          %s407 = scalar_lea.vmem [#allocation8], %s406
          %408 = dma.done %s404, 256
        $region60: #{tpu_custom_call.1} parent=55 // pred_fallthru
          _
      $region56: #{tpu_custom_call.1} parent=5 // pred_fallthru
        _
    $region6: #{tpu_custom_call.1} parent=1 // loop_footer
      %s21 = sadd.s32 1, %s17
    $region7: #{tpu_custom_call.1} parent=1 // loop_footer_branch
      %16 = sbr.rel target = $region3
    $region8: #{tpu_custom_call.1} parent=1 // loop_exit
      _
    %409 = vsyncpa [#allocation3], 1
    %s410 = scalar_lea.sflag [#allocation3], 1
    %411 = vsyncpa %s410, 1
    %412 = vsyncpa [#allocation6], 1
    %413 = vsyncpa [#allocation4], 1
    %s414 = scalar_lea.sflag [#allocation4], 1
    %415 = vsyncpa %s414, 1

</llo_original>
